<compile_context>
chip_gen: v7x
topology: tpu7x:2x2x1
jax: 0.10.0
libtpu: 0.0.40
codegen_flags: <defaults>
</compile_context>

<pallas_src>
import functools

import jax
import jax.numpy as jnp
from jax.experimental import pallas as pl
from jax.experimental.pallas import tpu as pltpu

OUT_PAD = 128  # lane-dense fused output / parameter-slab width (>= action_dim + 1)


def _round_up8(n):
    return ((n + 7) // 8) * 8


def actor_critic_kernel(x_ref, p_ref, out_ref, *, state_dim, hidden2,
                        action_dim, off_b1, off_w2, off_b2):
    """x_ref: [TB, S] f32; p_ref: packed [n_rows, 128] f32 param slab."""
    x = x_ref[...]                                     # [TB, S]

    # ---- static, tile-aligned views into the packed parameter slab ----
    w1 = p_ref[0:off_b1, :]                            # [S_pad, 128]
    b1 = p_ref[off_b1:off_b1 + 1, :]                   # [1, 128]
    w2 = p_ref[off_w2:off_w2 + hidden2, :]             # [2H, 128]
    b2 = p_ref[off_b2:off_b2 + 1, :]                   # [1, 128]

    # ---- fused layer 1 (actor || critic): [TB,S] @ [S,2H] -> [TB,2H] ----
    # (slice the tiny one-vreg weight/bias, never the [TB, .] activation)
    h = jnp.dot(x, w1[:state_dim, :hidden2],
                preferred_element_type=jnp.float32) + b1[:, :hidden2]
    h = jnp.maximum(h, 0.0)                            # one ReLU pass

    # ---- fused layer 2 (block-diagonal, lane-dense): [TB,2H] @ [2H,128] ----
    z = jnp.dot(h, w2, preferred_element_type=jnp.float32) + b2
    # z columns: [0, A) = actor logits, A = critic value, rest = exactly 0.

    # ---- masked, numerically stable softmax over the actor columns only ----
    bsz, width = z.shape
    col = jax.lax.broadcasted_iota(jnp.int32, (bsz, width), 1)
    actor_mask = col < action_dim
    value_mask = col == action_dim
    logits = jnp.where(actor_mask, z, -jnp.inf)
    m = jnp.max(logits, axis=-1, keepdims=True)
    e = jnp.exp(logits - m)                            # 0 outside actor cols
    denom = jnp.sum(e, axis=-1, keepdims=True)
    probs = e / denom                                  # exact divide: sums to 1

    # single wide unmasked store: cols [0,A)=probs, col A=value, rest=0
    out_ref[...] = jnp.where(value_mask, z, probs)


def pack_params(params):
    """Fuse actor/critic weights into ONE [n_rows, 128] f32 slab (do once).

    Layout (all segments 8-row aligned, 128 lanes wide):
      rows [0, 8)        : fused layer-1 weight  [wa1 | wc1]   (cols [0, 2H))
      rows [8, 16)       : fused layer-1 bias    [ba1 | bc1]   (row 8)
      rows [16, 16+2H)   : block-diag layer-2    [[wa2,0],[0,wc2]] (128 lanes)
      rows [16+2H, +8)   : fused layer-2 bias    (row 16+2H)
    """
    S, H = params["wa1"].shape
    A = params["wa2"].shape[1]
    H2 = 2 * H
    assert H2 <= OUT_PAD, "fused hidden width must fit in 128 lanes"
    assert A + 1 <= OUT_PAD

    off_b1 = _round_up8(S)
    off_w2 = off_b1 + 8
    off_b2 = off_w2 + _round_up8(H2)
    n_rows = off_b2 + 8

    slab = jnp.zeros((n_rows, OUT_PAD), jnp.float32)
    # layer 1: concatenate actor and critic along the output (lane) axis
    w1 = jnp.concatenate([params["wa1"], params["wc1"]], axis=1)      # [S, 2H]
    b1 = jnp.concatenate([params["ba1"], params["bc1"]], axis=1)      # [1, 2H]
    slab = slab.at[0:S, :H2].set(w1)
    slab = slab.at[off_b1, :H2].set(b1[0])
    # layer 2: explicit-zero block diagonal, padded to a 128-lane output slab
    slab = slab.at[off_w2:off_w2 + H, :A].set(params["wa2"])
    slab = slab.at[off_w2 + H:off_w2 + H2, A].set(params["wc2"][:, 0])
    slab = slab.at[off_b2, :A].set(params["ba2"][0])
    slab = slab.at[off_b2, A].set(params["bc2"][0, 0])

    return dict(packed=slab, offsets=(off_b1, off_w2, off_b2),
                state_dim=S, hidden2=H2, action_dim=A)


def actor_critic_forward(x, fused, *, block_b=None):
    """x: [B, state_dim] float32; fused: output of pack_params.

    block_b=None -> whole (tiny) problem in one VMEM block, no grid.
    block_b=TB   -> "parallel" batch grid (use when B is large, e.g. TB=512,
                    so v7x's second TensorCore participates and tiles stay
                    inside its 32 MiB scoped / 64 MiB physical VMEM).
    """
    B, S = x.shape
    assert S == fused["state_dim"]
    A = fused["action_dim"]
    H2 = fused["hidden2"]
    off_b1, off_w2, off_b2 = fused["offsets"]
    slab = fused["packed"]

    kernel = functools.partial(
        actor_critic_kernel, state_dim=S, hidden2=H2, action_dim=A,
        off_b1=off_b1, off_w2=off_w2, off_b2=off_b2)

    cost = pl.CostEstimate(
        flops=2 * B * S * H2 + 2 * B * H2 * OUT_PAD,
        transcendentals=B * OUT_PAD,
        bytes_accessed=(x.size + slab.size + B * OUT_PAD) * 4)

    if block_b is None or block_b >= B or B % block_b != 0:
        # single block: 2 input DMAs + 1 output DMA, everything in VMEM
        out = pl.pallas_call(
            kernel,
            out_shape=jax.ShapeDtypeStruct((B, OUT_PAD), jnp.float32),
            in_specs=[pl.BlockSpec(memory_space=pltpu.MemorySpace.VMEM)] * 2,
            out_specs=pl.BlockSpec(memory_space=pltpu.MemorySpace.VMEM),
            cost_estimate=cost,
        )(x, slab)
    else:
        # batched path: tile the batch, keep the param slab VMEM-resident
        out = pl.pallas_call(
            kernel,
            out_shape=jax.ShapeDtypeStruct((B, OUT_PAD), jnp.float32),
            grid_spec=pltpu.PrefetchScalarGridSpec(
                num_scalar_prefetch=0,
                grid=(B // block_b,),
                in_specs=[pl.BlockSpec((block_b, S), lambda i: (i, 0)),
                          pl.BlockSpec(slab.shape, lambda i: (0, 0))],
                out_specs=pl.BlockSpec((block_b, OUT_PAD), lambda i: (i, 0))),
            compiler_params=pltpu.CompilerParams(
                dimension_semantics=("parallel",)),
            cost_estimate=cost,
        )(x, slab)

    # free XLA slices of the lane-dense output slab
    probs = out[:, :A]
    value = out[:, A:A + 1]
    return probs, value


def init_params(key, state_dim, action_dim, hidden_dim):
    """Deterministic synthetic init (PyTorch-style uniform ranges)."""
    ks = jax.random.split(key, 8)

    def linear(kw, kb, fan_in, fan_out):
        bound = 1.0 / jnp.sqrt(float(fan_in))
        w = jax.random.uniform(kw, (fan_in, fan_out), jnp.float32, -bound, bound)
        b = jax.random.uniform(kb, (1, fan_out), jnp.float32, -bound, bound)
        return w, b

    wa1, ba1 = linear(ks[0], ks[1], state_dim, hidden_dim)
    wa2, ba2 = linear(ks[2], ks[3], hidden_dim, action_dim)
    wc1, bc1 = linear(ks[4], ks[5], state_dim, hidden_dim)
    wc2, bc2 = linear(ks[6], ks[7], hidden_dim, 1)
    return dict(wa1=wa1, ba1=ba1, wa2=wa2, ba2=ba2,
                wc1=wc1, bc1=bc1, wc2=wc2, bc2=bc2)


def reference_forward(x, p):
    ha = jnp.maximum(x @ p["wa1"] + p["ba1"], 0.0)
    probs = jax.nn.softmax(ha @ p["wa2"] + p["ba2"], axis=-1)
    hc = jnp.maximum(x @ p["wc1"] + p["bc1"], 0.0)
    value = hc @ p["wc2"] + p["bc2"]
    return probs, value


if __name__ == "__main__":
    # CartPole-like sizes: state_dim=4, action_dim=2, hidden=32, batch=8.
    B, STATE_DIM, ACTION_DIM, HIDDEN_DIM = 8, 4, 2, 32

    key = jax.random.PRNGKey(0)
    k_x, k_p, k_x2 = jax.random.split(key, 3)
    x = jax.random.normal(k_x, (B, STATE_DIM), dtype=jnp.float32)
    params = init_params(k_p, STATE_DIM, ACTION_DIM, HIDDEN_DIM)
    fused = pack_params(params)

    # --- single-block path (latency-optimal at tiny B) ---
    ref_probs, ref_value = reference_forward(x, params)
    probs, value = jax.block_until_ready(actor_critic_forward(x, fused))
    assert probs.shape == (B, ACTION_DIM) and value.shape == (B, 1)
    assert jnp.allclose(probs, ref_probs, atol=1e-4, rtol=1e-4)
    assert jnp.allclose(value, ref_value, atol=1e-4, rtol=1e-4)
    assert jnp.allclose(jnp.sum(probs, axis=-1), 1.0, atol=1e-4)

    # --- batched / gridded path (the v7x second-TensorCore variant) ---
    B2 = 64
    x2 = jax.random.normal(k_x2, (B2, STATE_DIM), dtype=jnp.float32)
    ref_p2, ref_v2 = reference_forward(x2, params)
    p2, v2 = jax.block_until_ready(actor_critic_forward(x2, fused, block_b=32))
    assert p2.shape == (B2, ACTION_DIM) and v2.shape == (B2, 1)
    assert jnp.allclose(p2, ref_p2, atol=1e-4, rtol=1e-4)
    assert jnp.allclose(v2, ref_v2, atol=1e-4, rtol=1e-4)
    assert jnp.allclose(jnp.sum(p2, axis=-1), 1.0, atol=1e-4)

    print("KERNEL_OK")
</pallas_src>

<mosaic_0001>
module attributes {stable_mosaic.version = 11 : i64} {
  func.func @actor_critic_kernel(%arg0: memref<8x4xf32, #tpu.memory_space<vmem>>, %arg1: memref<88x128xf32, #tpu.memory_space<vmem>>, %arg2: memref<8x128xf32, #tpu.memory_space<vmem>>) attributes {dimension_semantics = [], scalar_prefetch = 0 : i64, scratch_operands = 0 : i64, tpu.core_type = #tpu.core_type<tc>} {
    %c0 = arith.constant 0 : index
    %c0_0 = arith.constant 0 : index
    %0 = vector.load %arg0[%c0, %c0_0] : memref<8x4xf32, #tpu.memory_space<vmem>>, vector<8x4xf32>
    %c0_1 = arith.constant 0 : index
    %c0_2 = arith.constant 0 : index
    %1 = vector.load %arg1[%c0_1, %c0_2] : memref<88x128xf32, #tpu.memory_space<vmem>>, vector<8x128xf32>
    %c8 = arith.constant 8 : index
    %c0_3 = arith.constant 0 : index
    %2 = vector.load %arg1[%c8, %c0_3] : memref<88x128xf32, #tpu.memory_space<vmem>>, vector<1x128xf32>
    %c16 = arith.constant 16 : index
    %c0_4 = arith.constant 0 : index
    %3 = vector.load %arg1[%c16, %c0_4] : memref<88x128xf32, #tpu.memory_space<vmem>>, vector<64x128xf32>
    %c80 = arith.constant 80 : index
    %c0_5 = arith.constant 0 : index
    %4 = vector.load %arg1[%c80, %c0_5] : memref<88x128xf32, #tpu.memory_space<vmem>>, vector<1x128xf32>
    %5 = vector.extract_strided_slice %1 {offsets = [0, 0], sizes = [4, 64], strides = [1, 1]} : vector<8x128xf32> to vector<4x64xf32>
    %cst = arith.constant dense<0.000000e+00> : vector<8x64xf32>
    %6 = tpu.matmul %0, %5, %cst {dimension_numbers = #tpu.dot_dimension_numbers<[1], [0], [0], [1], [0, 0, 1, 1], [], []>} : vector<8x4xf32>, vector<4x64xf32>, vector<8x64xf32> -> vector<8x64xf32>
    %7 = vector.extract_strided_slice %2 {offsets = [0, 0], sizes = [1, 64], strides = [1, 1]} : vector<1x128xf32> to vector<1x64xf32>
    %8 = vector.broadcast %7 : vector<1x64xf32> to vector<8x64xf32>
    %9 = arith.addf %6, %8 : vector<8x64xf32>
    %cst_6 = arith.constant 0.000000e+00 : f32
    %10 = vector.broadcast %cst_6 : f32 to vector<8x64xf32>
    %11 = arith.maximumf %9, %10 : vector<8x64xf32>
    %cst_7 = arith.constant dense<0.000000e+00> : vector<8x128xf32>
    %12 = tpu.matmul %11, %3, %cst_7 {dimension_numbers = #tpu.dot_dimension_numbers<[1], [0], [0], [1], [0, 0, 1, 1], [], []>} : vector<8x64xf32>, vector<64x128xf32>, vector<8x128xf32> -> vector<8x128xf32>
    %13 = vector.broadcast %4 : vector<1x128xf32> to vector<8x128xf32>
    %14 = arith.addf %12, %13 : vector<8x128xf32>
    %15 = tpu.iota {dimensions = array<i32: 1>} : vector<8x128xi32>
    %c2_i32 = arith.constant 2 : i32
    %16 = vector.broadcast %c2_i32 : i32 to vector<8x128xi32>
    %17 = arith.cmpi slt, %15, %16 : vector<8x128xi32>
    %c2_i32_8 = arith.constant 2 : i32
    %18 = vector.broadcast %c2_i32_8 : i32 to vector<8x128xi32>
    %19 = arith.cmpi eq, %15, %18 : vector<8x128xi32>
    %cst_9 = arith.constant 0xFF800000 : f32
    %20 = vector.broadcast %cst_9 : f32 to vector<8x128xf32>
    %21 = arith.select %17, %14, %20 : vector<8x128xi1>, vector<8x128xf32>
    %cst_10 = arith.constant dense<0xFF800000> : vector<8xf32>
    %22 = vector.multi_reduction <maximumf>, %21, %cst_10 [1] : vector<8x128xf32> to vector<8xf32>
    %23 = vector.shape_cast %22 : vector<8xf32> to vector<8x1xf32>
    %24 = vector.broadcast %23 : vector<8x1xf32> to vector<8x128xf32>
    %25 = arith.subf %21, %24 : vector<8x128xf32>
    %26 = math.exp %25 : vector<8x128xf32>
    %cst_11 = arith.constant dense<0.000000e+00> : vector<8xf32>
    %27 = vector.multi_reduction <add>, %26, %cst_11 [1] : vector<8x128xf32> to vector<8xf32>
    %28 = vector.shape_cast %27 : vector<8xf32> to vector<8x1xf32>
    %29 = vector.broadcast %28 : vector<8x1xf32> to vector<8x128xf32>
    %30 = arith.divf %26, %29 : vector<8x128xf32>
    %31 = arith.select %19, %14, %30 : vector<8x128xi1>, vector<8x128xf32>
    %c0_12 = arith.constant 0 : index
    %c0_13 = arith.constant 0 : index
    %32 = vector.load %arg2[%c0_12, %c0_13] : memref<8x128xf32, #tpu.memory_space<vmem>>, vector<8x128xf32>
    tpu.vector_store %arg2[%c0_12, %c0_13], %31 {strides = array<i32>} : memref<8x128xf32, #tpu.memory_space<vmem>>, vector<8x128xf32>,
    return
  }
}

</mosaic_0001>

<llo_original>
// kernel: tpu_custom_call.1
$region0: #{tpu_custom_call.1}
  #allocation0 [shape = 'u32[]', space=smem, size = 0x4, offset = 0x4, fixed_abs, tag = 'smem constant byte address 0x4 - core index']
  #allocation1 [shape = 'u32[144,128]{1,0:T(1,128)}', space=vmem, size = 0x12000, scoped, tag = 'internal scratch']
  %s0 = inlined_call_operand.vmem [shape: f32[8,4], index: 0, kind: input, shape index: {}]
  %s1 = inlined_call_operand.hbm [shape: f32[88,128], index: 1, kind: input, shape index: {}]
  %s2 = inlined_call_operand.hbm [shape: f32[8,128], index: 2, kind: output, shape index: {}]
  %s3 = sld [smem:[#allocation0]]
  $region22: #{tpu_custom_call.1} parent=0
    _
  %s5 = ssub.s32 1, %s3
  %s6 = scalar_select 0, %s5, %s3
  $region1: #{tpu_custom_call.1} parent=0
    #allocation2 [shape = 'u8[45056]{0}', space=vmem, size = 0xb000, scoped, tag = 'input window, operand 1, single buffered']
    #allocation3 [shape = 's32[1]{0}', space=sflag, size = 0x4, scoped, tag = 'scoped memory for tpu_custom_call.1']
    #allocation4 [shape = 's32[1]{0}', space=sflag, size = 0x4, scoped, tag = 'scoped memory for tpu_custom_call.1']
    #allocation5 [shape = 'u8[4096]{0}', space=vmem, size = 0x1000, scoped, tag = 'output window, operand 0, single buffered']
    %7 = vsyncpa [#allocation3], 0
    %8 = vsyncpa [#allocation4], 0
    // Predicated region
    $region2: #{tpu_custom_call.1} parent=1 // pred_check
      _
    $region3: #{tpu_custom_call.1} parent=1 // pred_check_branch
      %10 = sbr.rel (0) target = $region5
    $region4: #{tpu_custom_call.1} parent=1 // pred_region
      _
    $region5: #{tpu_custom_call.1} parent=1 // pred_fallthru
      _
    // Predicated region
    $region6: #{tpu_custom_call.1} parent=1 // pred_check
      _
    $region7: #{tpu_custom_call.1} parent=1 // pred_check_branch
      %12 = sbr.rel (0) target = $region9
    $region8: #{tpu_custom_call.1} parent=1 // pred_region
      %s14 = ssub.s32 1408, 1408
      %15 = vsyncadd [#allocation3], %s14
      %s16 = sshll.u32 [#allocation2], 4
      %s17 = int_to_ptr.vmem [resolvable:$true] %s16
      %22 = dma.hbm_to_vmem [thread:$0]  %s1, 1408, %s17, [#allocation3], 128, 128, 8
    $region9: #{tpu_custom_call.1} parent=1 // pred_fallthru
      _
    // Predicated region
    $region10: #{tpu_custom_call.1} parent=1 // pred_check
      _
    $region11: #{tpu_custom_call.1} parent=1 // pred_check_branch
      %24 = sbr.rel (0) target = $region13
    $region12: #{tpu_custom_call.1} parent=1 // pred_region
      %25 = dma.done [#allocation3], 1408
    $region13: #{tpu_custom_call.1} parent=1 // pred_fallthru
      _
    %v26 = vld [vmem:[%s0] sm:$0xff]
    %v27 = vld [vmem:[#allocation2] sm:$0xff]
    %v28 = vld [vmem:[#allocation2 + $0x8] sm:$0x1]
    %v29 = vld [vmem:[#allocation2 + $0x10] sm:$0xff]
    %v30 = vld [vmem:[#allocation2 + $0x18] sm:$0xff]
    %v31 = vld [vmem:[#allocation2 + $0x20] sm:$0xff]
    %v32 = vld [vmem:[#allocation2 + $0x28] sm:$0xff]
    %v33 = vld [vmem:[#allocation2 + $0x30] sm:$0xff]
    %v34 = vld [vmem:[#allocation2 + $0x38] sm:$0xff]
    %v35 = vld [vmem:[#allocation2 + $0x40] sm:$0xff]
    %v36 = vld [vmem:[#allocation2 + $0x48] sm:$0xff]
    %v37 = vld [vmem:[#allocation2 + $0x50] sm:$0x1]
    %v38 = vlaneseq
    %v39 = vshrl.u32 %v38, 7
    %v40 = vsub.s32 0, %v39
    %v41 = vrot.slane %v28, %v40
    %vm42 = vcmask 31744
    %v44 = vsel %vm42, %v26, 0
    %vm46 = vcmask 1043456
    %v48 = vsel %vm46, %v27, 0
    %50 = vmatprep.subr.mxu0 0.0
    %51 = vmatpush1.msra.mxu0 %v48
    %52 = vmatprep.subr.mxu0 0.0
    %53 = vmatpush1.msra.mxu0 0.0
    %54 = vmatprep.subr.mxu0 0.0
    %55 = vmatpush1.msra.mxu0 0.0
    %56 = vmatprep.subr.mxu0 0.0
    %57 = vmatpush1.msra.mxu0 0.0
    %58 = vmatprep.subr.mxu0 0.0
    %59 = vmatpush1.msra.mxu0 0.0
    %60 = vmatprep.subr.mxu0 0.0
    %61 = vmatpush1.msra.mxu0 0.0
    %62 = vmatprep.subr.mxu0 0.0
    %63 = vmatpush1.msra.mxu0 0.0
    %64 = vmatprep.subr.mxu0 0.0
    %65 = vmatpush1.msra.mxu0 0.0
    %66 = vmatprep.subr.mxu0 0.0
    %67 = vmatpush1.msra.mxu0 0.0
    %68 = vmatprep.subr.mxu0 0.0
    %69 = vmatpush1.msra.mxu0 0.0
    %70 = vmatprep.subr.mxu0 0.0
    %71 = vmatpush1.msra.mxu0 0.0
    %72 = vmatprep.subr.mxu0 0.0
    %73 = vmatpush1.msra.mxu0 0.0
    %74 = vmatprep.subr.mxu0 0.0
    %75 = vmatpush1.msra.mxu0 0.0
    %76 = vmatprep.subr.mxu0 0.0
    %77 = vmatpush1.msra.mxu0 0.0
    %78 = vmatprep.subr.mxu0 0.0
    %79 = vmatpush1.msra.mxu0 0.0
    %80 = vmatprep.subr.mxu0 0.0
    %81 = vmatpush1.msra.mxu0 0.0
    %82 = vmatprep.subr.mxu0 0.0
    %83 = vmatpush1.msra.mxu0 0.0
    %84 = vmatprep.subr.mxu0 0.0
    %85 = vmatpush1.msra.mxu0 0.0
    %86 = vmatprep.subr.mxu0 0.0
    %87 = vmatpush1.msra.mxu0 0.0
    %88 = vmatprep.subr.mxu0 0.0
    %89 = vmatpush1.msra.mxu0 0.0
    %90 = vmatprep.subr.mxu0 0.0
    %91 = vmatpush1.msra.mxu0 0.0
    %92 = vmatprep.subr.mxu0 0.0
    %93 = vmatpush1.msra.mxu0 0.0
    %94 = vmatprep.subr.mxu0 0.0
    %95 = vmatpush1.msra.mxu0 0.0
    %96 = vmatprep.subr.mxu0 0.0
    %97 = vmatpush1.msra.mxu0 0.0
    %98 = vmatprep.subr.mxu0 0.0
    %99 = vmatpush1.msra.mxu0 0.0
    %100 = vmatprep.subr.mxu0 0.0
    %101 = vmatpush1.msra.mxu0 0.0
    %102 = vmatprep.subr.mxu0 0.0
    %103 = vmatpush1.msra.mxu0 0.0
    %104 = vmatprep.subr.mxu0 0.0
    %105 = vmatpush1.msra.mxu0 0.0
    %106 = vmatprep.subr.mxu0 0.0
    %107 = vmatpush1.msra.mxu0 0.0
    %108 = vmatprep.subr.mxu0 0.0
    %109 = vmatpush1.msra.mxu0 0.0
    %110 = vmatprep.subr.mxu0 0.0
    %111 = vmatpush1.msra.mxu0 0.0
    %112 = vmatprep.subr.mxu0 0.0
    %113 = vmatpush1.msra.mxu0 0.0
    %114 = vmatprep.mubr.f32.mxu0 0.0
    %115 = vmatmul.mubr.f32.gmra.mrb[0].mxu0 %v44
    %v116 = vpop.f32.mrb[0].mxu0
    %v117 = vadd.f32 %v41, %v116
    %v118 = vpop.f32.mrb[0].mxu0
    %119 = vdwg.mxu0
    %v120 = vmax.f32 %v117, 0.0
    %v121 = vlaneseq
    %v122 = vshrl.u32 %v121, 7
    %v123 = vsub.s32 0, %v122
    %v124 = vrot.slane %v37, %v123
    %vm125 = vcmask 523264
    %v127 = vsel %vm125, %v120, 0
    %129 = vmatprep.subr.mxu0 0.0
    %130 = vmatpush1.msra.mxu0 %v29
    %131 = vmatprep.subr.mxu0 0.0
    %132 = vmatpush1.msra.mxu0 %v30
    %133 = vmatprep.subr.mxu0 0.0
    %134 = vmatpush1.msra.mxu0 %v31
    %135 = vmatprep.subr.mxu0 0.0
    %136 = vmatpush1.msra.mxu0 %v32
    %137 = vmatprep.subr.mxu0 0.0
    %138 = vmatpush1.msra.mxu0 %v33
    %139 = vmatprep.subr.mxu0 0.0
    %140 = vmatpush1.msra.mxu0 %v34
    %141 = vmatprep.subr.mxu0 0.0
    %142 = vmatpush1.msra.mxu0 %v35
    %143 = vmatprep.subr.mxu0 0.0
    %144 = vmatpush1.msra.mxu0 %v36
    %145 = vmatprep.subr.mxu0 0.0
    %146 = vmatpush1.msra.mxu0 0.0
    %147 = vmatprep.subr.mxu0 0.0
    %148 = vmatpush1.msra.mxu0 0.0
    %149 = vmatprep.subr.mxu0 0.0
    %150 = vmatpush1.msra.mxu0 0.0
    %151 = vmatprep.subr.mxu0 0.0
    %152 = vmatpush1.msra.mxu0 0.0
    %153 = vmatprep.subr.mxu0 0.0
    %154 = vmatpush1.msra.mxu0 0.0
    %155 = vmatprep.subr.mxu0 0.0
    %156 = vmatpush1.msra.mxu0 0.0
    %157 = vmatprep.subr.mxu0 0.0
    %158 = vmatpush1.msra.mxu0 0.0
    %159 = vmatprep.subr.mxu0 0.0
    %160 = vmatpush1.msra.mxu0 0.0
    %161 = vmatprep.subr.mxu0 0.0
    %162 = vmatpush1.msra.mxu0 0.0
    %163 = vmatprep.subr.mxu0 0.0
    %164 = vmatpush1.msra.mxu0 0.0
    %165 = vmatprep.subr.mxu0 0.0
    %166 = vmatpush1.msra.mxu0 0.0
    %167 = vmatprep.subr.mxu0 0.0
    %168 = vmatpush1.msra.mxu0 0.0
    %169 = vmatprep.subr.mxu0 0.0
    %170 = vmatpush1.msra.mxu0 0.0
    %171 = vmatprep.subr.mxu0 0.0
    %172 = vmatpush1.msra.mxu0 0.0
    %173 = vmatprep.subr.mxu0 0.0
    %174 = vmatpush1.msra.mxu0 0.0
    %175 = vmatprep.subr.mxu0 0.0
    %176 = vmatpush1.msra.mxu0 0.0
    %177 = vmatprep.subr.mxu0 0.0
    %178 = vmatpush1.msra.mxu0 0.0
    %179 = vmatprep.subr.mxu0 0.0
    %180 = vmatpush1.msra.mxu0 0.0
    %181 = vmatprep.subr.mxu0 0.0
    %182 = vmatpush1.msra.mxu0 0.0
    %183 = vmatprep.subr.mxu0 0.0
    %184 = vmatpush1.msra.mxu0 0.0
    %185 = vmatprep.subr.mxu0 0.0
    %186 = vmatpush1.msra.mxu0 0.0
    %187 = vmatprep.subr.mxu0 0.0
    %188 = vmatpush1.msra.mxu0 0.0
    %189 = vmatprep.subr.mxu0 0.0
    %190 = vmatpush1.msra.mxu0 0.0
    %191 = vmatprep.subr.mxu0 0.0
    %192 = vmatpush1.msra.mxu0 0.0
    %193 = vmatprep.mubr.f32.mxu0 0.0
    %194 = vmatmul.mubr.f32.gmra.mrb[0].mxu0 %v127
    %v195 = vpop.f32.mrb[0].mxu0
    %v196 = vadd.f32 %v124, %v195
    %v197 = vpop.f32.mrb[0].mxu0
    %198 = vdwg.mxu0
    %v199 = vlaneseq
    %v200 = vand.u32 %v199, 127
    %vm201 = vcmp.lt.s32.totalorder %v200, 2
    %vm202 = vcmp.eq.s32.totalorder %v200, 2
    %v203 = vsel %vm201, %v196, -inf
    %204 = vmax.xlane.f32.xlu0 %v203
    %v205 = vpop.xlane.xlu0 %204
    %v206 = vsub.f32 %v203, %v205
    %v207 = vmul.f32 %v206, 1.442695
    %v208 = vpow.pop %v207
    %209 = vadd.xlane.f32.xlu0 %v208
    %v210 = vpop.xlane.xlu0 %209
    %v211 = vrcp.pop %v210
    %v212 = vmul.f32 %v208, %v211
    %v213 = vsel %vm202, %v196, %v212
    %214 = vst [vmem:[#allocation5] sm:$0xff] %v213
    // Predicated region
    $region14: #{tpu_custom_call.1} parent=1 // pred_check
      _
    $region15: #{tpu_custom_call.1} parent=1 // pred_check_branch
      %216 = sbr.rel (0) target = $region17
    $region16: #{tpu_custom_call.1} parent=1 // pred_region
      %s218 = ssub.s32 128, 128
      %219 = vsyncadd [#allocation4], %s218
      %s221 = sshll.u32 [#allocation5], 4
      %s222 = int_to_ptr.vmem [resolvable:$true] %s221
      %224 = dma.vmem_to_hbm [thread:$0]  %s222, 128, %s2, [#allocation4]
    $region17: #{tpu_custom_call.1} parent=1 // pred_fallthru
      _
    // Predicated region
    $region18: #{tpu_custom_call.1} parent=1 // pred_check
      _
    $region19: #{tpu_custom_call.1} parent=1 // pred_check_branch
      %226 = sbr.rel (0) target = $region21
    $region20: #{tpu_custom_call.1} parent=1 // pred_region
      %227 = dma.done [#allocation4], 128
    $region21: #{tpu_custom_call.1} parent=1 // pred_fallthru
      _
    %228 = vsyncpa [#allocation3], 1
    %229 = vsyncpa [#allocation4], 1

</llo_original>
